<compile_context>
chip_gen: v7x
topology: tpu7x:2x2x1
jax: 0.10.0
libtpu: 0.0.40
codegen_flags: <defaults>
</compile_context>

<pallas_src>
import functools
import math

import jax
import jax.numpy as jnp
from jax.experimental import pallas as pl
from jax.experimental.pallas import tpu as pltpu


def _round_up(x, m):
    return ((x + m - 1) // m) * m


def _awing_kernel(*refs, alpha, omega, theta, log_ratio, inv_ratio, inv_eps,
                  apply_weight, needs_mask, tile_rows, n_rows,
                  tiles_per_core):
    if apply_weight:
        w_ref, pred_ref, target_ref, acc_ref = refs
    else:
        pred_ref, target_ref, acc_ref = refs

    c = pl.program_id(0)          # core-split axis (size 1 on v5e/v6e)
    i = pl.program_id(1)          # reduction ("arbitrary") axis

    @pl.when(i == 0)
    def _():
        acc_ref[...] = jnp.zeros_like(acc_ref)

    p = pred_ref[...].astype(jnp.float32)
    t = target_ref[...].astype(jnp.float32)
    if apply_weight:
        w = w_ref[...].astype(jnp.float32)        # (tile_rows, 1) broadcast
        p = p * w
        t = t * w

    delta = jnp.abs(t - p)
    expo = alpha - t                               # alpha - target
    is_small = delta < theta

    # One variable-base log; clamped so delta == 0 underflows exp() to 0
    # (matches torch.pow(0, positive) == 0) and never produces -inf * 0.
    log_d = jnp.log(jnp.maximum(delta * inv_eps, 1e-38))
    x = jnp.where(is_small, log_d, log_ratio)      # pre-exp branch select
    pow_sel = jnp.exp(expo * x)                    # small-branch pow OR pow_t
    lp = jnp.log1p(pow_sel)                        # shared by both branches

    # Large-branch slope; in that branch pow_sel == (theta/eps)^expo.
    # In the small branch A is garbage but its term is gated off by the where.
    A = (omega * inv_ratio * inv_eps) * expo * pow_sel / (1.0 + pow_sel)
    losses = omega * lp + jnp.where(is_small, 0.0, A * (delta - theta))

    if needs_mask:
        # Cheap column mask: sublane-only iota + compare, one select / vreg.
        tile_idx = c * tiles_per_core + i
        row0 = tile_idx * tile_rows
        rows = jax.lax.broadcasted_iota(jnp.int32, (tile_rows, 1), 0)
        valid = (row0 + rows) < n_rows             # (tile_rows, 1)
        losses = jnp.where(valid, losses, 0.0)     # select: NaN-safe

    hw = losses.shape[1]
    # Sublane-group split (layout-free) + reduce over the non-layout axis:
    # pure vector adds, no XLU cross-lane work per step.
    acc_ref[...] += losses.reshape(tile_rows // 8, 8, hw).sum(axis=0)


def adaptive_wing_loss(output, target, target_weight=None, *, alpha=2.1,
                       omega=14.0, epsilon=1.0, theta=0.5,
                       use_target_weight=False, loss_weight=1.0,
                       num_cores=1, target_block_bytes=2 << 20):
    """Scalar Adaptive-Wing loss matching AdaptiveWingLoss.forward.

    num_cores: keep 1 on single-TensorCore chips (v5e/v6e); set 2 on v7x to
    shard row tiles across both TensorCores (CORE_PARALLEL leading axis).
    """
    N, K, H, W = output.shape
    nk = N * K
    hw = H * W
    n_elems = nk * hw

    # Free metadata reshapes; no dtype upcast.
    pred2 = output.reshape(nk, hw)
    targ2 = target.reshape(nk, hw)

    # Keep blocks lane-dense: pad the spatial dim to a multiple of 128 only
    # when needed.  Zero-padded elements contribute exactly 0 to the loss
    # (delta == 0 -> clamped-log exp underflows -> log1p(0) == 0).
    if hw % 128 != 0:
        pad = _round_up(hw, 128) - hw
        pred2 = jnp.pad(pred2, ((0, 0), (0, pad)))
        targ2 = jnp.pad(targ2, ((0, 0), (0, pad)))
    hw_k = pred2.shape[1]

    # ~2 MiB input blocks (2 inputs x 2 buffers = 8 MiB: safe on v5e's 16 MiB
    # scoped VMEM default, headroom on v6e/v7x).  Rows a multiple of 8.
    itemsize = jnp.dtype(output.dtype).itemsize
    bytes_per_row = hw_k * itemsize
    tile_rows = max(8, (target_block_bytes // max(bytes_per_row, 1)) // 8 * 8)
    rows_per_core = pl.cdiv(nk, num_cores)
    tile_rows = min(tile_rows, _round_up(rows_per_core, 8))

    n_tiles = pl.cdiv(nk, tile_rows)
    tiles_per_core = pl.cdiv(n_tiles, num_cores)
    needs_mask = (num_cores * tiles_per_core * tile_rows) != nk

    def row_block(c, i):
        # Clamp so fully-out-of-range tiles (only possible when num_cores > 1)
        # never index past the array; their rows are zeroed in-kernel.
        return jnp.minimum(c * tiles_per_core + i, n_tiles - 1)

    kernel = functools.partial(
        _awing_kernel,
        alpha=float(alpha), omega=float(omega), theta=float(theta),
        log_ratio=float(math.log(theta / epsilon)),
        inv_ratio=float(epsilon / theta),
        inv_eps=float(1.0 / epsilon),
        apply_weight=bool(use_target_weight),
        needs_mask=bool(needs_mask),
        tile_rows=int(tile_rows),
        n_rows=int(nk),
        tiles_per_core=int(tiles_per_core),
    )

    inputs = []
    in_specs = []
    if use_target_weight:
        inputs.append(target_weight.reshape(nk, 1))
        in_specs.append(
            pl.BlockSpec((tile_rows, 1), lambda c, i: (row_block(c, i), 0)))
    inputs += [pred2, targ2]
    in_specs += [
        pl.BlockSpec((tile_rows, hw_k), lambda c, i: (row_block(c, i), 0)),
        pl.BlockSpec((tile_rows, hw_k), lambda c, i: (row_block(c, i), 0)),
    ]

    if num_cores > 1:
        dim_sem = (pltpu.CORE_PARALLEL, pltpu.ARBITRARY)   # v7x: real TC split
    else:
        dim_sem = ("arbitrary", "arbitrary")

    partials = pl.pallas_call(
        kernel,
        out_shape=jax.ShapeDtypeStruct((num_cores, 8, hw_k), jnp.float32),
        grid_spec=pltpu.PrefetchScalarGridSpec(
            num_scalar_prefetch=0,
            grid=(num_cores, tiles_per_core),
            in_specs=in_specs,
            # Per-core resident accumulator block (revisited across i).
            out_specs=pl.BlockSpec((None, 8, hw_k), lambda c, i: (c, 0, 0)),
        ),
        compiler_params=pltpu.CompilerParams(dimension_semantics=dim_sem),
    )(*inputs)

    # Tiny final reduction + mean * loss_weight in plain XLA.
    return jnp.sum(partials) * jnp.float32(loss_weight / n_elems)


def _reference_awing(output, target, target_weight, *, alpha=2.1, omega=14.0,
                     epsilon=1.0, theta=0.5, use_target_weight=False,
                     loss_weight=1.0):
    if use_target_weight:
        w = target_weight[..., None]
        output = output * w
        target = target * w
    delta = jnp.abs(target - output)
    ratio = theta / epsilon
    expo = alpha - target
    A = omega * (1 / (1 + jnp.power(ratio, expo))) * expo * \
        jnp.power(ratio, expo - 1) * (1 / epsilon)
    C = theta * A - omega * jnp.log(1 + jnp.power(ratio, expo))
    losses = jnp.where(delta < theta,
                       omega * jnp.log(1 + jnp.power(delta / epsilon, expo)),
                       A * delta - C)
    return jnp.mean(losses) * loss_weight


if __name__ == "__main__":
    key = jax.random.PRNGKey(0)
    k1, k2, k3, k4, k5, k6 = jax.random.split(key, 6)

    # Case 1/2: aligned shapes (hw multiple of 128, nk multiple of 8).
    N, K, H, W = 2, 4, 16, 16
    output = jax.random.uniform(k1, (N, K, H, W), dtype=jnp.float32)
    target = jax.random.uniform(k2, (N, K, H, W), dtype=jnp.float32)
    target_weight = jax.random.uniform(k3, (N, K, 1), dtype=jnp.float32)

    loss = jax.block_until_ready(adaptive_wing_loss(output, target, target_weight))
    loss_w = jax.block_until_ready(
        adaptive_wing_loss(output, target, target_weight,
                           use_target_weight=True, loss_weight=2.0))

    ref = _reference_awing(output, target, target_weight)
    ref_w = _reference_awing(output, target, target_weight,
                             use_target_weight=True, loss_weight=2.0)
    assert jnp.allclose(loss, ref, rtol=1e-5, atol=1e-5), (loss, ref)
    assert jnp.allclose(loss_w, ref_w, rtol=1e-5, atol=1e-5), (loss_w, ref_w)

    # Case 3: ragged shapes exercising the row mask + lane padding paths.
    N2, K2, H2, W2 = 2, 3, 12, 12
    output2 = jax.random.uniform(k4, (N2, K2, H2, W2), dtype=jnp.float32)
    target2 = jax.random.uniform(k5, (N2, K2, H2, W2), dtype=jnp.float32)
    weight2 = jax.random.uniform(k6, (N2, K2, 1), dtype=jnp.float32)

    loss2 = jax.block_until_ready(
        adaptive_wing_loss(output2, target2, weight2,
                           use_target_weight=True, loss_weight=0.5))
    ref2 = _reference_awing(output2, target2, weight2,
                            use_target_weight=True, loss_weight=0.5)
    assert jnp.allclose(loss2, ref2, rtol=1e-5, atol=1e-5), (loss2, ref2)

    print("KERNEL_OK")
</pallas_src>

<mosaic_0001>
module attributes {stable_mosaic.version = 11 : i64} {
  func.func @_awing_kernel(%arg0: i32, %arg1: i32, %arg2: memref<8x256xf32, #tpu.memory_space<vmem>>, %arg3: memref<8x256xf32, #tpu.memory_space<vmem>>, %arg4: memref<1x8x256xf32, #tpu.memory_space<vmem>>) attributes {dimension_semantics = [#tpu.dimension_semantics<arbitrary>, #tpu.dimension_semantics<arbitrary>], iteration_bounds = array<i64: 1, 1>, scalar_prefetch = 0 : i64, scratch_operands = 0 : i64, tpu.core_type = #tpu.core_type<tc>, window_params = [{transform_indices = @transform_0, window_bounds = array<i64: 8, 256>}, {transform_indices = @transform_1, window_bounds = array<i64: 8, 256>}, {transform_indices = @transform_2, window_bounds = array<i64: 1, 8, 256>}]} {
    %c0_i32 = arith.constant 0 : i32
    %0 = arith.cmpi eq, %arg1, %c0_i32 : i32
    %1 = arith.extui %0 : i1 to i32
    %c0_i32_0 = arith.constant 0 : i32
    %2 = arith.cmpi ne, %1, %c0_i32_0 : i32
    scf.if %2 {
      %cst_20 = arith.constant 0.000000e+00 : f32
      %43 = vector.broadcast %cst_20 : f32 to vector<8x256xf32>
      %c0_21 = arith.constant 0 : index
      %c0_22 = arith.constant 0 : index
      %c0_23 = arith.constant 0 : index
      %44 = vector.load %arg4[%c0_21, %c0_22, %c0_23] : memref<1x8x256xf32, #tpu.memory_space<vmem>>, vector<1x8x256xf32>
      %45 = vector.shape_cast %44 : vector<1x8x256xf32> to vector<8x256xf32>
      %46 = vector.shape_cast %43 : vector<8x256xf32> to vector<1x8x256xf32>
      tpu.vector_store %arg4[%c0_21, %c0_22, %c0_23], %46 {strides = array<i32>} : memref<1x8x256xf32, #tpu.memory_space<vmem>>, vector<1x8x256xf32>,
    } else {
    }
    %c0 = arith.constant 0 : index
    %c0_1 = arith.constant 0 : index
    %3 = vector.load %arg2[%c0, %c0_1] : memref<8x256xf32, #tpu.memory_space<vmem>>, vector<8x256xf32>
    %c0_2 = arith.constant 0 : index
    %c0_3 = arith.constant 0 : index
    %4 = vector.load %arg3[%c0_2, %c0_3] : memref<8x256xf32, #tpu.memory_space<vmem>>, vector<8x256xf32>
    %5 = arith.subf %4, %3 : vector<8x256xf32>
    %6 = math.absf %5 : vector<8x256xf32>
    %cst = arith.constant 2.100000e+00 : f32
    %7 = vector.broadcast %cst : f32 to vector<8x256xf32>
    %8 = arith.subf %7, %4 : vector<8x256xf32>
    %cst_4 = arith.constant 5.000000e-01 : f32
    %9 = vector.broadcast %cst_4 : f32 to vector<8x256xf32>
    %10 = arith.cmpf olt, %6, %9 : vector<8x256xf32>
    %cst_5 = arith.constant 1.000000e+00 : f32
    %11 = vector.broadcast %cst_5 : f32 to vector<8x256xf32>
    %12 = arith.mulf %6, %11 : vector<8x256xf32>
    %cst_6 = arith.constant 9.99999935E-39 : f32
    %13 = vector.broadcast %cst_6 : f32 to vector<8x256xf32>
    %14 = arith.maximumf %12, %13 : vector<8x256xf32>
    %15 = math.log %14 : vector<8x256xf32>
    %cst_7 = arith.constant -0.693147182 : f32
    %16 = vector.broadcast %cst_7 : f32 to vector<8x256xf32>
    %17 = arith.select %10, %15, %16 : vector<8x256xi1>, vector<8x256xf32>
    %18 = arith.mulf %8, %17 : vector<8x256xf32>
    %19 = math.exp %18 : vector<8x256xf32>
    %20 = math.log1p %19 : vector<8x256xf32>
    %cst_8 = arith.constant 2.800000e+01 : f32
    %21 = vector.broadcast %cst_8 : f32 to vector<8x256xf32>
    %22 = arith.mulf %21, %8 : vector<8x256xf32>
    %23 = arith.mulf %22, %19 : vector<8x256xf32>
    %cst_9 = arith.constant 1.000000e+00 : f32
    %24 = vector.broadcast %cst_9 : f32 to vector<8x256xf32>
    %25 = arith.addf %24, %19 : vector<8x256xf32>
    %26 = arith.divf %23, %25 : vector<8x256xf32>
    %cst_10 = arith.constant 1.400000e+01 : f32
    %27 = vector.broadcast %cst_10 : f32 to vector<8x256xf32>
    %28 = arith.mulf %27, %20 : vector<8x256xf32>
    %cst_11 = arith.constant 5.000000e-01 : f32
    %29 = vector.broadcast %cst_11 : f32 to vector<8x256xf32>
    %30 = arith.subf %6, %29 : vector<8x256xf32>
    %31 = arith.mulf %26, %30 : vector<8x256xf32>
    %cst_12 = arith.constant 0.000000e+00 : f32
    %32 = vector.broadcast %cst_12 : f32 to vector<8x256xf32>
    %33 = arith.select %10, %32, %31 : vector<8x256xi1>, vector<8x256xf32>
    %34 = arith.addf %28, %33 : vector<8x256xf32>
    %c0_13 = arith.constant 0 : index
    %c0_14 = arith.constant 0 : index
    %c0_15 = arith.constant 0 : index
    %35 = vector.load %arg4[%c0_13, %c0_14, %c0_15] : memref<1x8x256xf32, #tpu.memory_space<vmem>>, vector<1x8x256xf32>
    %36 = vector.shape_cast %35 : vector<1x8x256xf32> to vector<8x256xf32>
    %37 = vector.shape_cast %34 : vector<8x256xf32> to vector<1x8x256xf32>
    %cst_16 = arith.constant dense<0.000000e+00> : vector<8x256xf32>
    %38 = vector.multi_reduction <add>, %37, %cst_16 [0] : vector<1x8x256xf32> to vector<8x256xf32>
    %39 = arith.addf %36, %38 : vector<8x256xf32>
    %c0_17 = arith.constant 0 : index
    %c0_18 = arith.constant 0 : index
    %c0_19 = arith.constant 0 : index
    %40 = vector.load %arg4[%c0_17, %c0_18, %c0_19] : memref<1x8x256xf32, #tpu.memory_space<vmem>>, vector<1x8x256xf32>
    %41 = vector.shape_cast %40 : vector<1x8x256xf32> to vector<8x256xf32>
    %42 = vector.shape_cast %39 : vector<8x256xf32> to vector<1x8x256xf32>
    tpu.vector_store %arg4[%c0_17, %c0_18, %c0_19], %42 {strides = array<i32>} : memref<1x8x256xf32, #tpu.memory_space<vmem>>, vector<1x8x256xf32>,
    return
  }
  func.func @transform_0(%arg0: i32, %arg1: i32) -> (i32, i32) {
    %c1_i32 = arith.constant 1 : i32
    %0 = arith.muli %arg0, %c1_i32 : i32
    %1 = arith.addi %0, %arg1 : i32
    %c0_i32 = arith.constant 0 : i32
    %2 = arith.minsi %1, %c0_i32 : i32
    %c0_i32_0 = arith.constant 0 : i32
    %c0_i32_1 = arith.constant 0 : i32
    return %2, %c0_i32_0 : i32, i32
  }
  func.func @transform_1(%arg0: i32, %arg1: i32) -> (i32, i32) {
    %c1_i32 = arith.constant 1 : i32
    %0 = arith.muli %arg0, %c1_i32 : i32
    %1 = arith.addi %0, %arg1 : i32
    %c0_i32 = arith.constant 0 : i32
    %2 = arith.minsi %1, %c0_i32 : i32
    %c0_i32_0 = arith.constant 0 : i32
    %c0_i32_1 = arith.constant 0 : i32
    return %2, %c0_i32_0 : i32, i32
  }
  func.func @transform_2(%arg0: i32, %arg1: i32) -> (i32, i32, i32) {
    %c0_i32 = arith.constant 0 : i32
    %c0_i32_0 = arith.constant 0 : i32
    %c0_i32_1 = arith.constant 0 : i32
    return %arg0, %c0_i32, %c0_i32_0 : i32, i32, i32
  }
}

</mosaic_0001>

<llo_original>
// kernel: tpu_custom_call.1
$region0: #{tpu_custom_call.1}
  #allocation0 [shape = 'u32[]', space=smem, size = 0x4, offset = 0x4, fixed_abs, tag = 'smem constant byte address 0x4 - core index']
  #allocation1 [shape = 'u32[144,128]{1,0:T(1,128)}', space=vmem, size = 0x12000, scoped, tag = 'internal scratch']
  %s0 = inlined_call_operand.hbm [shape: f32[8,256], index: 0, kind: input, shape index: {}]
  %s1 = inlined_call_operand.hbm [shape: f32[8,256], index: 1, kind: input, shape index: {}]
  %s2 = inlined_call_operand.hbm [shape: f32[1,8,256], index: 2, kind: output, shape index: {}]
  %s3 = sld [smem:[#allocation0]]
  $region30: #{tpu_custom_call.1} parent=0
    _
  %s5 = ssub.s32 1, %s3
  %s6 = scalar_select 0, %s5, %s3
  $region1: #{tpu_custom_call.1} parent=0
    #allocation2 [shape = 'u8[8192]{0}', space=vmem, size = 0x2000, scoped, tag = 'input window, operand 0, single buffered']
    #allocation3 [shape = 's32[1]{0}', space=sflag, size = 0x4, scoped, tag = 'scoped memory for tpu_custom_call.1']
    #allocation4 [shape = 's32[1]{0}', space=sflag, size = 0x4, scoped, tag = 'scoped memory for tpu_custom_call.1']
    #allocation5 [shape = 'u8[8192]{0}', space=vmem, size = 0x2000, scoped, tag = 'input window, operand 1, single buffered']
    #allocation6 [shape = 's32[1]{0}', space=sflag, size = 0x4, scoped, tag = 'scoped memory for tpu_custom_call.1']
    #allocation7 [shape = 'u8[8192]{0}', space=vmem, size = 0x2000, scoped, tag = 'output window, operand 0, single buffered']
    %7 = vsyncpa [#allocation3], 0
    %8 = vsyncpa [#allocation6], 0
    %9 = vsyncpa [#allocation4], 0
    // Predicated region
    $region2: #{tpu_custom_call.1} parent=1 // pred_check
      _
    $region3: #{tpu_custom_call.1} parent=1 // pred_check_branch
      %11 = sbr.rel (0) target = $region5
    $region4: #{tpu_custom_call.1} parent=1 // pred_region
      %s12 = sadd.s32 0, 0
      %p13 = scmp.lt.s32.totalorder %s12, 0
      %s14 = scalar_select %p13, %s12, 0
      %s16 = ssub.s32 256, 256
      %17 = vsyncadd [#allocation3], %s16
      %s18 = smul.addr %s14, 2
      %s19 = smul.addr %s18, 128
      %s20 = scalar_lea.hbm %s0, %s19
      %s22 = sshll.u32 [#allocation2], 4
      %s23 = int_to_ptr.vmem [resolvable:$true] %s22
      %25 = dma.hbm_to_vmem [thread:$0]  %s20, 256, %s23, [#allocation3]
    $region5: #{tpu_custom_call.1} parent=1 // pred_fallthru
      _
    // Predicated region
    $region6: #{tpu_custom_call.1} parent=1 // pred_check
      _
    $region7: #{tpu_custom_call.1} parent=1 // pred_check_branch
      %27 = sbr.rel (0) target = $region9
    $region8: #{tpu_custom_call.1} parent=1 // pred_region
      %s28 = sadd.s32 0, 0
      %p29 = scmp.lt.s32.totalorder %s28, 0
      %s30 = scalar_select %p29, %s28, 0
      %s32 = ssub.s32 256, 256
      %33 = vsyncadd [#allocation6], %s32
      %s34 = smul.addr %s30, 2
      %s35 = smul.addr %s34, 128
      %s36 = scalar_lea.hbm %s1, %s35
      %s38 = sshll.u32 [#allocation5], 4
      %s39 = int_to_ptr.vmem [resolvable:$true] %s38
      %41 = dma.hbm_to_vmem [thread:$0]  %s36, 256, %s39, [#allocation6]
    $region9: #{tpu_custom_call.1} parent=1 // pred_fallthru
      _
    // Predicated region
    $region10: #{tpu_custom_call.1} parent=1 // pred_check
      _
    $region11: #{tpu_custom_call.1} parent=1 // pred_check_branch
      %43 = sbr.rel (0) target = $region13
    $region12: #{tpu_custom_call.1} parent=1 // pred_region
      %44 = dma.done [#allocation3], 256
    $region13: #{tpu_custom_call.1} parent=1 // pred_fallthru
      _
    // Predicated region
    $region14: #{tpu_custom_call.1} parent=1 // pred_check
      _
    $region15: #{tpu_custom_call.1} parent=1 // pred_check_branch
      %46 = sbr.rel (0) target = $region17
    $region16: #{tpu_custom_call.1} parent=1 // pred_region
      %47 = dma.done [#allocation6], 256
    $region17: #{tpu_custom_call.1} parent=1 // pred_fallthru
      _
    %s48 = sadd.s32 0, 0
    %p49 = scmp.lt.s32.totalorder %s48, 0
    %s50 = scalar_select %p49, %s48, 0
    %s51 = sadd.s32 0, 0
    %p52 = scmp.lt.s32.totalorder %s51, 0
    %s53 = scalar_select %p52, %s51, 0
    %p54 = scmp.eq.s32.totalorder 0, 0
    // Predicated region
    $region18: #{tpu_custom_call.1} parent=1 // pred_check
      %p55 = pneg %p54
    $region19: #{tpu_custom_call.1} parent=1 // pred_check_branch
      %57 = sbr.rel (%p55) target = $region21
    $region20: #{tpu_custom_call.1} parent=1 // pred_region
      %58 = vst [vmem:[#allocation7] sm:$0xff] 0.0
      %59 = vst [vmem:[#allocation7 + $0x8] sm:$0xff] 0.0
    $region21: #{tpu_custom_call.1} parent=1 // pred_fallthru
      _
    %v60 = vld [vmem:[#allocation2] sm:$0xff]
    %v61 = vld [vmem:[#allocation2 + $0x8] sm:$0xff]
    %v62 = vld [vmem:[#allocation5] sm:$0xff]
    %v63 = vld [vmem:[#allocation5 + $0x8] sm:$0xff]
    %v64 = vsub.f32 %v62, %v60
    %v65 = vsub.f32 %v63, %v61
    %v66 = vand.u32 2147483647, %v64
    %v67 = vand.u32 2147483647, %v65
    %v68 = vsub.f32 2.1, %v62
    %v69 = vsub.f32 2.1, %v63
    %vm70 = vcmp.lt.f32.partialorder %v66, 0.5
    %vm71 = vcmp.lt.f32.partialorder %v67, 0.5
    %v72 = vmax.f32 %v66, 1e-38
    %v73 = vmax.f32 %v67, 1e-38
    %v74 = vlog2.pop %v72
    %v75 = vmul.f32 %v74, 0.6931472
    %v76 = vlog2.pop %v73
    %v77 = vmul.f32 %v76, 0.6931472
    %v78 = vsel %vm70, %v75, -0.6931472
    %v79 = vsel %vm71, %v77, -0.6931472
    %v80 = vmul.f32 %v68, %v78
    %v81 = vmul.f32 %v69, %v79
    %v82 = vmul.f32 %v80, 1.442695
    %v83 = vpow.pop %v82
    %v84 = vmul.f32 %v81, 1.442695
    %v85 = vpow.pop %v84
    %v86 = vadd.f32 %v83, 1.0
    %v87 = vlog2.pop %v86
    %v88 = vmul.f32 %v87, 0.6931472
    %v89 = vmul.f32 -0.5, %v83
    %v90 = vadd.f32 %v89, 1.0
    %v91 = vmul.f32 %v90, %v83
    %v92 = vand.u32 2147483647, %v83
    %vm93 = vcmp.lt.f32.partialorder %v92, 0.0004427343
    %v94 = vsel %vm93, %v91, %v88
    %v95 = vadd.f32 %v85, 1.0
    %v96 = vlog2.pop %v95
    %v97 = vmul.f32 %v96, 0.6931472
    %v98 = vmul.f32 -0.5, %v85
    %v99 = vadd.f32 %v98, 1.0
    %v100 = vmul.f32 %v99, %v85
    %v101 = vand.u32 2147483647, %v85
    %vm102 = vcmp.lt.f32.partialorder %v101, 0.0004427343
    %v103 = vsel %vm102, %v100, %v97
    %v104 = vmul.f32 %v68, 28.0
    %v105 = vmul.f32 %v69, 28.0
    %v106 = vmul.f32 %v104, %v83
    %v107 = vmul.f32 %v105, %v85
    %v108 = vadd.f32 %v83, 1.0
    %v109 = vadd.f32 %v85, 1.0
    %v110 = vrcp.pop %v108
    %v111 = vmul.f32 %v106, %v110
    %v112 = vrcp.pop %v109
    %v113 = vmul.f32 %v107, %v112
    %v114 = vmul.f32 %v94, 14.0
    %v115 = vmul.f32 %v103, 14.0
    %v116 = vsub.f32 %v66, 0.5
    %v117 = vsub.f32 %v67, 0.5
    %v118 = vmul.f32 %v111, %v116
    %v119 = vmul.f32 %v113, %v117
    %v120 = vsel %vm70, 0.0, %v118
    %v121 = vsel %vm71, 0.0, %v119
    %v122 = vadd.f32 %v114, %v120
    %v123 = vadd.f32 %v115, %v121
    %v124 = vld [vmem:[#allocation7] sm:$0xff]
    %v125 = vld [vmem:[#allocation7 + $0x8] sm:$0xff]
    %v126 = vadd.f32 %v122, 0.0
    %v127 = vadd.f32 %v123, 0.0
    %v128 = vadd.f32 %v124, %v126
    %v129 = vadd.f32 %v125, %v127
    %130 = vst [vmem:[#allocation7] sm:$0xff] %v128
    %131 = vst [vmem:[#allocation7 + $0x8] sm:$0xff] %v129
    // Predicated region
    $region22: #{tpu_custom_call.1} parent=1 // pred_check
      _
    $region23: #{tpu_custom_call.1} parent=1 // pred_check_branch
      %133 = sbr.rel (0) target = $region25
    $region24: #{tpu_custom_call.1} parent=1 // pred_region
      %s135 = ssub.s32 256, 256
      %136 = vsyncadd [#allocation4], %s135
      %s138 = sshll.u32 [#allocation7], 4
      %s139 = int_to_ptr.vmem [resolvable:$true] %s138
      %141 = dma.vmem_to_hbm [thread:$0]  %s139, 256, %s2, [#allocation4]
    $region25: #{tpu_custom_call.1} parent=1 // pred_fallthru
      _
    // Predicated region
    $region26: #{tpu_custom_call.1} parent=1 // pred_check
      _
    $region27: #{tpu_custom_call.1} parent=1 // pred_check_branch
      %143 = sbr.rel (0) target = $region29
    $region28: #{tpu_custom_call.1} parent=1 // pred_region
      %144 = dma.done [#allocation4], 256
    $region29: #{tpu_custom_call.1} parent=1 // pred_fallthru
      _
    %145 = vsyncpa [#allocation3], 1
    %146 = vsyncpa [#allocation6], 1
    %147 = vsyncpa [#allocation4], 1

</llo_original>
